<compile_context>
chip_gen: v6e
topology: v6e:2x2x1
jax: 0.10.0
libtpu: 0.0.40
codegen_flags: <defaults>
</compile_context>

<pallas_src>
import functools

import jax
import jax.numpy as jnp
from jax import lax
from jax.experimental import pallas as pl
from jax.experimental.pallas import tpu as pltpu

_LN_EPS = 1e-5                          # torch.nn.LayerNorm default
_VMEM_TILE_BUDGET = 24 * 1024 * 1024    # conservative: also fits v7x scoped VMEM
_VMEM_LIMIT = 32 * 1024 * 1024


def _round_up(x, m):
    return (x + m - 1) // m * m


def _choose_row_tile(rows, din_p, dout_p, itemsize, tm_max=512):
    """Row tile: sublane-aligned (8 f32 / 16 bf16), >=2 grid steps when possible
    (so v7x's two TensorCores both get work), and sized so the single-buffered
    weight plus double-buffered x/out tiles fit a VMEM budget valid on
    v5e / v6e / v7x."""
    sub = 8 if itemsize >= 4 else 16
    tm = min(tm_max, _round_up(rows, sub))
    if tm >= 2 * sub and _round_up(rows, sub) <= tm:
        tm = _round_up(pl.cdiv(rows, 2), sub)       # ensure at least 2 grid steps
    w_bytes = din_p * dout_p * itemsize
    while tm > sub and w_bytes + 2 * tm * (din_p + dout_p) * itemsize > _VMEM_TILE_BUDGET:
        tm -= sub
    return max(tm, sub)


# ---------------------------------------------------------------------------
# Fused Linear [+ Swish] [+ residual] [+ LayerNorm] kernel (ResBlock & friends)
# ---------------------------------------------------------------------------
def _fused_linear_kernel(x_ref, w_ref, b_ref, *refs,
                         apply_swish, apply_residual, apply_ln, d_true):
    if apply_ln:
        gamma_ref, beta_ref, o_ref = refs
    else:
        (o_ref,) = refs

    # MXU matmul in the operands' native dtype (bf16 stays bf16), f32 accumulate.
    z = jnp.dot(x_ref[...], w_ref[...], preferred_element_type=jnp.float32)
    z = z + b_ref[...].astype(jnp.float32)

    if apply_swish:
        z = z * jax.nn.sigmoid(z)       # numerically-stable; exp/recip go to the EUP

    if apply_residual:
        # Re-read x from VMEM rather than keeping the pre-dot value live across
        # the matmul (lower vreg pressure for large row tiles).
        z = z + x_ref[...].astype(jnp.float32)

    if apply_ln:
        # Single-pass statistics: one sweep for sum and sum-of-squares.  Padded
        # feature columns are exactly zero, so dividing the raw sums by the true
        # feature count d_true gives the unpadded mean / variance.
        inv_d = 1.0 / d_true
        s = jnp.sum(z, axis=-1, keepdims=True)
        ss = jnp.sum(z * z, axis=-1, keepdims=True)
        mean = s * inv_d
        var = jnp.maximum(ss * inv_d - mean * mean, 0.0)
        z = (z - mean) * lax.rsqrt(var + _LN_EPS)
        z = z * gamma_ref[...].astype(jnp.float32) + beta_ref[...].astype(jnp.float32)

    o_ref[...] = z.astype(o_ref.dtype)


def fused_linear(x, w, b, *, gamma=None, beta=None, apply_swish=False,
                 apply_residual=False, tm_max=512):
    """y = [LayerNorm]( [x +] [swish](x @ w + b) ) over rows of x.

    x: (rows, din); w: (din, dout) in (in, out) layout (== torch weight.T);
    b/gamma/beta: (dout,).  Feature dims are zero-padded to multiples of 128 so
    the MXU sees full lanes and stores are lane-dense; padding is sliced off."""
    rows, din = x.shape
    assert w.shape[0] == din
    dout = w.shape[1]
    apply_ln = gamma is not None
    if apply_residual:
        assert din == dout, "residual path requires input_dim == output_dim"

    din_p, dout_p = _round_up(din, 128), _round_up(dout, 128)
    itemsize = jnp.dtype(x.dtype).itemsize
    tm = _choose_row_tile(rows, din_p, dout_p, itemsize, tm_max)
    rows_p = _round_up(rows, tm)
    grid = rows_p // tm
    # TODO(synk): for very large D (f32 D >= ~4096) the resident (D, D) weight no
    # longer fits v7x VMEM; that regime needs a K-tiled grid axis + f32 accumulator.

    xp = jnp.pad(x, ((0, rows_p - rows), (0, din_p - din)))
    wp = jnp.pad(w.astype(x.dtype), ((0, din_p - din), (0, dout_p - dout)))
    bp = jnp.pad(b.astype(x.dtype), (0, dout_p - dout)).reshape(1, dout_p)

    # Constant-index parameters: single-buffer them so the (D, D) weight is not
    # double-buffered in VMEM.
    resident = dict(pipeline_mode=pl.Buffered(1))
    operands = [xp, wp, bp]
    in_specs = [
        pl.BlockSpec((tm, din_p), lambda i: (i, 0)),
        pl.BlockSpec((din_p, dout_p), lambda i: (0, 0), **resident),
        pl.BlockSpec((1, dout_p), lambda i: (0, 0), **resident),
    ]
    if apply_ln:
        gp = jnp.pad(gamma.astype(x.dtype), (0, dout_p - dout)).reshape(1, dout_p)
        bep = jnp.pad(beta.astype(x.dtype), (0, dout_p - dout)).reshape(1, dout_p)
        operands += [gp, bep]
        in_specs += [pl.BlockSpec((1, dout_p), lambda i: (0, 0), **resident),
                     pl.BlockSpec((1, dout_p), lambda i: (0, 0), **resident)]

    kernel = functools.partial(
        _fused_linear_kernel, apply_swish=apply_swish,
        apply_residual=apply_residual, apply_ln=apply_ln, d_true=dout)

    out = pl.pallas_call(
        kernel,
        out_shape=jax.ShapeDtypeStruct((rows_p, dout_p), x.dtype),
        grid_spec=pltpu.PrefetchScalarGridSpec(
            num_scalar_prefetch=0,
            grid=(grid,),
            in_specs=in_specs,
            out_specs=pl.BlockSpec((tm, dout_p), lambda i: (i, 0)),
        ),
        compiler_params=pltpu.CompilerParams(
            dimension_semantics=("parallel",),
            vmem_limit_bytes=_VMEM_LIMIT),
    )(*operands)
    return out[:rows, :dout]


# ---------------------------------------------------------------------------
# GRU layer: per-timestep recurrence kernel (hidden state in VMEM scratch)
# ---------------------------------------------------------------------------
def _gru_step_kernel(gx_ref, whh_ref, bhh_ref, h0_ref, out_ref, h_scr, *, hp):
    t = pl.program_id(0)

    @pl.when(t == 0)
    def _():
        h_scr[...] = h0_ref[...].astype(jnp.float32)

    h = h_scr[...]
    w = whh_ref[...]
    gx = gx_ref[0].astype(jnp.float32)                               # (B, 3*hp)
    gh = jnp.dot(h.astype(w.dtype), w, preferred_element_type=jnp.float32)
    gh = gh + bhh_ref[...].astype(jnp.float32)

    r = jax.nn.sigmoid(gx[:, :hp] + gh[:, :hp])
    z = jax.nn.sigmoid(gx[:, hp:2 * hp] + gh[:, hp:2 * hp])
    n = jnp.tanh(gx[:, 2 * hp:] + r * gh[:, 2 * hp:])
    h_new = (1.0 - z) * n + z * h

    h_scr[...] = h_new
    out_ref[0] = h_new.astype(out_ref.dtype)


def gru_layer_pallas(x_seq, w_ih, w_hh, b_ih, b_hh, h0):
    """One batch_first GRU layer.  Torch-layout weights: w_ih (3H, Din),
    w_hh (3H, H), biases (3H,), gate order [r, z, n].  Returns ((B,T,H), (B,H))."""
    B, T, din = x_seq.shape
    H = w_hh.shape[1]
    hp = _round_up(H, 128)                 # lane-dense hidden width
    bp_ = _round_up(max(B, 8), 8)          # sublane-aligned batch
    dt = x_seq.dtype

    # Pack gate weights into hp-strided, lane-aligned slots; the padded lanes
    # stay exactly zero through the whole recurrence.
    w_ih_p = jnp.zeros((din, 3 * hp), dt)
    w_hh_p = jnp.zeros((hp, 3 * hp), dt)
    b_ih_p = jnp.zeros((3 * hp,), dt)
    b_hh_p = jnp.zeros((3 * hp,), dt)
    for g in range(3):
        w_ih_p = w_ih_p.at[:, g * hp:g * hp + H].set(w_ih[g * H:(g + 1) * H, :].T.astype(dt))
        w_hh_p = w_hh_p.at[:H, g * hp:g * hp + H].set(w_hh[g * H:(g + 1) * H, :].T.astype(dt))
        b_ih_p = b_ih_p.at[g * hp:g * hp + H].set(b_ih[g * H:(g + 1) * H].astype(dt))
        b_hh_p = b_hh_p.at[g * hp:g * hp + H].set(b_hh[g * H:(g + 1) * H].astype(dt))

    # Input projections for all timesteps in one lane-dense MXU pass.
    gx = fused_linear(x_seq.reshape(B * T, din), w_ih_p, b_ih_p)     # (B*T, 3*hp)
    gx = gx.reshape(B, T, 3 * hp).transpose(1, 0, 2)                 # (T, B, 3*hp)
    gx = jnp.pad(gx, ((0, 0), (0, bp_ - B), (0, 0)))
    h0_p = jnp.pad(h0.astype(dt), ((0, bp_ - B), (0, hp - H)))

    resident = dict(pipeline_mode=pl.Buffered(1))
    out = pl.pallas_call(
        functools.partial(_gru_step_kernel, hp=hp),
        out_shape=jax.ShapeDtypeStruct((T, bp_, hp), dt),
        grid_spec=pltpu.PrefetchScalarGridSpec(
            num_scalar_prefetch=0,
            grid=(T,),
            in_specs=[
                pl.BlockSpec((1, bp_, 3 * hp), lambda t: (t, 0, 0)),
                pl.BlockSpec((hp, 3 * hp), lambda t: (0, 0), **resident),
                pl.BlockSpec((1, 3 * hp), lambda t: (0, 0), **resident),
                pl.BlockSpec((bp_, hp), lambda t: (0, 0), **resident),
            ],
            out_specs=pl.BlockSpec((1, bp_, hp), lambda t: (t, 0, 0)),
            scratch_shapes=[pltpu.VMEM((bp_, hp), jnp.float32)],
        ),
        compiler_params=pltpu.CompilerParams(
            dimension_semantics=("arbitrary",),     # sequential recurrence over time
            vmem_limit_bytes=_VMEM_LIMIT),
    )(gx, w_hh_p, b_hh_p.reshape(1, 3 * hp), h0_p)

    seq = out.transpose(1, 0, 2)[:B, :, :H]                          # (B, T, H)
    return seq, seq[:, -1, :]


# ---------------------------------------------------------------------------
# Full RNNModel forward (eval mode) built from the Pallas kernels
# ---------------------------------------------------------------------------
def rnn_model_forward(x, params, h_state=None):
    B, T, din = x.shape
    gru = params["gru"]
    H = gru[0][1].shape[1]
    L = len(gru)
    if h_state is None:
        h_state = jnp.zeros((L, B, H), x.dtype)

    layer_in = x
    h_last = []
    for l in range(L):
        w_ih, w_hh, b_ih, b_hh = gru[l]
        layer_in, h_l = gru_layer_pallas(layer_in, w_ih, w_hh, b_ih, b_hh, h_state[l])
        h_last.append(h_l)
    rnn_out = layer_in.reshape(B * T, H)

    # TODO(synk): nn.Dropout inside the ResBlocks is eval-mode identity here;
    # training-mode dropout RNG is not reproduced.
    w, b, g, be = params["input_layer"]
    out = fused_linear(x.reshape(B * T, din), w, b, gamma=g, beta=be,
                       apply_swish=True, apply_residual=False)

    out = jnp.concatenate([out, rnn_out], axis=-1)
    wm, bm = params["merge"]
    out = fused_linear(out, wm, bm, apply_swish=True)

    for w, b, g, be in params["backbones"]:
        out = fused_linear(out, w, b, gamma=g, beta=be,
                           apply_swish=True, apply_residual=True)

    wo, bo = params["out"]
    out = fused_linear(out, wo, bo)
    return out.reshape(B, T, -1), jnp.stack(h_last)


# ---------------------------------------------------------------------------
# Pure-JAX reference (mirrors the PyTorch forward, eval mode)
# ---------------------------------------------------------------------------
_HI = lax.Precision.HIGHEST


def _swish_ref(x):
    return x * jax.nn.sigmoid(x)


def _layer_norm_ref(x, g, b):
    m = jnp.mean(x, axis=-1, keepdims=True)
    v = jnp.mean((x - m) ** 2, axis=-1, keepdims=True)
    return (x - m) / jnp.sqrt(v + _LN_EPS) * g + b


def rnn_model_forward_ref(x, params, h_state=None):
    B, T, din = x.shape
    gru = params["gru"]
    H = gru[0][1].shape[1]
    L = len(gru)
    if h_state is None:
        h_state = jnp.zeros((L, B, H), x.dtype)

    layer_in = x
    h_last = []
    for l in range(L):
        w_ih, w_hh, b_ih, b_hh = gru[l]

        def step(h, x_t, w_ih=w_ih, w_hh=w_hh, b_ih=b_ih, b_hh=b_hh):
            gi = jnp.dot(x_t, w_ih.T, precision=_HI) + b_ih
            gh = jnp.dot(h, w_hh.T, precision=_HI) + b_hh
            r = jax.nn.sigmoid(gi[:, :H] + gh[:, :H])
            z = jax.nn.sigmoid(gi[:, H:2 * H] + gh[:, H:2 * H])
            n = jnp.tanh(gi[:, 2 * H:] + r * gh[:, 2 * H:])
            h_new = (1.0 - z) * n + z * h
            return h_new, h_new

        h_l, ys = lax.scan(step, h_state[l], layer_in.transpose(1, 0, 2))
        layer_in = ys.transpose(1, 0, 2)
        h_last.append(h_l)
    rnn_out = layer_in.reshape(B * T, H)

    w, b, g, be = params["input_layer"]
    out = _layer_norm_ref(
        _swish_ref(jnp.dot(x.reshape(B * T, din), w, precision=_HI) + b), g, be)
    out = jnp.concatenate([out, rnn_out], axis=-1)
    wm, bm = params["merge"]
    out = _swish_ref(jnp.dot(out, wm, precision=_HI) + bm)
    for w, b, g, be in params["backbones"]:
        out = _layer_norm_ref(out + _swish_ref(jnp.dot(out, w, precision=_HI) + b), g, be)
    wo, bo = params["out"]
    out = jnp.dot(out, wo, precision=_HI) + bo
    return out.reshape(B, T, -1), jnp.stack(h_last)


if __name__ == "__main__":
    key = jax.random.PRNGKey(0)
    B, T = 2, 8
    input_dim, output_dim, hidden = 16, 8, 32
    hidden_dims = [hidden] * 4
    rnn_num_layers = 3
    dt = jnp.float32

    keys = iter(jax.random.split(key, 64))

    def uniform(shape, fan_in):
        bound = 1.0 / float(fan_in) ** 0.5
        return jax.random.uniform(next(keys), shape, minval=-bound, maxval=bound, dtype=dt)

    gru_params = []
    in_sz = input_dim
    for _ in range(rnn_num_layers):
        gru_params.append((uniform((3 * hidden, in_sz), hidden),
                           uniform((3 * hidden, hidden), hidden),
                           uniform((3 * hidden,), hidden),
                           uniform((3 * hidden,), hidden)))
        in_sz = hidden

    def linear(din, dout):          # (in, out) layout == torch weight.T
        return uniform((din, dout), din), uniform((dout,), din)

    w_in, b_in = linear(input_dim, hidden_dims[0])
    params = {
        "gru": gru_params,
        "input_layer": (w_in, b_in,
                        jnp.ones((hidden_dims[0],), dt), jnp.zeros((hidden_dims[0],), dt)),
        "merge": linear(hidden_dims[0] + hidden_dims[-1], hidden_dims[0]),
        "backbones": [(*linear(di, do), jnp.ones((do,), dt), jnp.zeros((do,), dt))
                      for di, do in zip(hidden_dims[:-1], hidden_dims[1:])],
        "out": linear(hidden_dims[-1], output_dim),
    }

    x = jax.random.normal(next(keys), (B, T, input_dim), dtype=dt)

    out, h_state = rnn_model_forward(x, params)
    out = jax.block_until_ready(out)
    h_state = jax.block_until_ready(h_state)

    ref_out, ref_h = rnn_model_forward_ref(x, params)

    assert out.shape == (B, T, output_dim)
    assert h_state.shape == (rnn_num_layers, B, hidden)
    # Tolerance allows for MXU default-precision f32 matmul passes vs the
    # HIGHEST-precision XLA reference.
    assert jnp.allclose(out, ref_out, atol=3e-2, rtol=3e-2), "output mismatch vs reference"
    assert jnp.allclose(h_state, ref_h, atol=3e-2, rtol=3e-2), "h_state mismatch vs reference"

    # Also exercise the native-bf16 MXU path of the fused ResBlock kernel.
    xb = jax.random.normal(next(keys), (B * T, hidden), dtype=jnp.bfloat16)
    wb = uniform((hidden, hidden), hidden).astype(jnp.bfloat16)
    yb = fused_linear(xb, wb, jnp.zeros((hidden,), jnp.bfloat16),
                      gamma=jnp.ones((hidden,), jnp.bfloat16),
                      beta=jnp.zeros((hidden,), jnp.bfloat16),
                      apply_swish=True, apply_residual=True)
    yb = jax.block_until_ready(yb)
    assert bool(jnp.all(jnp.isfinite(yb.astype(jnp.float32))))

    print("KERNEL_OK")
</pallas_src>

<mosaic_0001>
module attributes {stable_mosaic.version = 11 : i64} {
  func.func @_fused_linear_kernel(%arg0: i32, %arg1: memref<8x128xf32, #tpu.memory_space<vmem>>, %arg2: memref<128x384xf32, #tpu.memory_space<vmem>>, %arg3: memref<1x384xf32, #tpu.memory_space<vmem>>, %arg4: memref<8x384xf32, #tpu.memory_space<vmem>>) attributes {dimension_semantics = [#tpu.dimension_semantics<parallel>], iteration_bounds = array<i64: 2>, scalar_prefetch = 0 : i64, scratch_operands = 0 : i64, tpu.core_type = #tpu.core_type<tc>, window_params = [{transform_indices = @transform_0, window_bounds = array<i64: 8, 128>}, {pipeline_mode = #tpu.pipeline_mode<synchronous>, transform_indices = @transform_1, window_bounds = array<i64: 128, 384>}, {pipeline_mode = #tpu.pipeline_mode<synchronous>, transform_indices = @transform_2, window_bounds = array<i64: 1, 384>}, {transform_indices = @transform_3, window_bounds = array<i64: 8, 384>}]} {
    %c0 = arith.constant 0 : index
    %c0_0 = arith.constant 0 : index
    %0 = vector.load %arg1[%c0, %c0_0] : memref<8x128xf32, #tpu.memory_space<vmem>>, vector<8x128xf32>
    %c0_1 = arith.constant 0 : index
    %c0_2 = arith.constant 0 : index
    %1 = vector.load %arg2[%c0_1, %c0_2] : memref<128x384xf32, #tpu.memory_space<vmem>>, vector<128x384xf32>
    %cst = arith.constant dense<0.000000e+00> : vector<8x384xf32>
    %2 = tpu.matmul %0, %1, %cst {dimension_numbers = #tpu.dot_dimension_numbers<[1], [0], [0], [1], [0, 0, 1, 1], [], []>} : vector<8x128xf32>, vector<128x384xf32>, vector<8x384xf32> -> vector<8x384xf32>
    %c0_3 = arith.constant 0 : index
    %c0_4 = arith.constant 0 : index
    %3 = vector.load %arg3[%c0_3, %c0_4] : memref<1x384xf32, #tpu.memory_space<vmem>>, vector<1x384xf32>
    %4 = vector.broadcast %3 : vector<1x384xf32> to vector<8x384xf32>
    %5 = arith.addf %2, %4 : vector<8x384xf32>
    %c0_5 = arith.constant 0 : index
    %c0_6 = arith.constant 0 : index
    %6 = vector.load %arg4[%c0_5, %c0_6] : memref<8x384xf32, #tpu.memory_space<vmem>>, vector<8x384xf32>
    tpu.vector_store %arg4[%c0_5, %c0_6], %5 {strides = array<i32>} : memref<8x384xf32, #tpu.memory_space<vmem>>, vector<8x384xf32>,
    return
  }
  func.func @transform_0(%arg0: i32) -> (i32, i32) {
    %c0_i32 = arith.constant 0 : i32
    %c0_i32_0 = arith.constant 0 : i32
    return %arg0, %c0_i32 : i32, i32
  }
  func.func @transform_1(%arg0: i32) -> (i32, i32) {
    %c0_i32 = arith.constant 0 : i32
    %c0_i32_0 = arith.constant 0 : i32
    %c0_i32_1 = arith.constant 0 : i32
    return %c0_i32, %c0_i32_0 : i32, i32
  }
  func.func @transform_2(%arg0: i32) -> (i32, i32) {
    %c0_i32 = arith.constant 0 : i32
    %c0_i32_0 = arith.constant 0 : i32
    %c0_i32_1 = arith.constant 0 : i32
    return %c0_i32, %c0_i32_0 : i32, i32
  }
  func.func @transform_3(%arg0: i32) -> (i32, i32) {
    %c0_i32 = arith.constant 0 : i32
    %c0_i32_0 = arith.constant 0 : i32
    return %arg0, %c0_i32 : i32, i32
  }
}

</mosaic_0001>

<llo_original>
// kernel: tpu_custom_call.1
$region0: #{tpu_custom_call.1}
  #allocation0 [shape = 'u32[]', space=smem, size = 0x4, offset = 0x4, fixed_abs, tag = 'smem constant byte address 0x4 - core index']
  #allocation1 [shape = 'u32[144,128]{1,0:T(1,128)}', space=vmem, size = 0x12000, scoped, tag = 'internal scratch']
  %s0 = inlined_call_operand.hbm [shape: f32[16,128], index: 0, kind: input, shape index: {}]
  %s1 = inlined_call_operand.hbm [shape: f32[128,384], index: 1, kind: input, shape index: {}]
  %s2 = inlined_call_operand.vmem [shape: f32[1,384], index: 2, kind: input, shape index: {}]
  %s3 = inlined_call_operand.hbm [shape: f32[16,384], index: 3, kind: output, shape index: {}]
  %s4 = sld [smem:[#allocation0]]
  $region53: #{tpu_custom_call.1} parent=0
    _
  %s6 = ssub.s32 1, %s4
  %s7 = scalar_select 0, %s6, %s4
  $region1: #{tpu_custom_call.1} parent=0
    #allocation2 [shape = 'u8[8192]{0}', space=vmem, size = 0x2000, scoped, tag = 'input window, operand 0']
    #allocation3 [shape = 's32[2]{0}', space=sflag, size = 0x8, scoped, tag = 'scoped memory for tpu_custom_call.1']
    #allocation4 [shape = 's32[2]{0}', space=sflag, size = 0x8, scoped, tag = 'scoped memory for tpu_custom_call.1']
    #allocation5 [shape = 'u8[196608]{0}', space=vmem, size = 0x30000, scoped, tag = 'input window, operand 1, single buffered']
    #allocation6 [shape = 's32[1]{0}', space=sflag, size = 0x4, scoped, tag = 'scoped memory for tpu_custom_call.1']
    #allocation7 [shape = 'u8[24576]{0}', space=vmem, size = 0x6000, scoped, tag = 'output window, operand 0']
    %8 = vsyncpa [#allocation3], 0
    %s9 = scalar_lea.sflag [#allocation3], 1
    %10 = vsyncpa %s9, 0
    %11 = vsyncpa [#allocation6], 0
    %12 = vsyncpa [#allocation4], 0
    %s13 = scalar_lea.sflag [#allocation4], 1
    %14 = vsyncpa %s13, 0
    loop: start=0, step=1, limit=4
    $region2: #{tpu_custom_call.1} parent=1 // loop_pre_header
      _
    $region3: #{tpu_custom_call.1} parent=1 // loop_header
      %s16 = sphi 0, %s20
      %p17 = scmp.ge.s32.totalorder %s16, 4
      %s26 = sphi 0, %s28
      %s29 = sphi 0, %s26
      %s30 = sphi 0, %s29
      %s46 = sphi 0, %s30
      %s50 = sphi 0, %s50
      %s52 = sphi 0, %s50
      %s53 = sphi 0, %s52
      %s67 = sphi 0, %s53
      %s71 = sphi 0, %s71
      %s73 = sphi 0, %s71
      %s74 = sphi 0, %s73
      %s88 = sphi 0, %s74
      %s94 = sphi 0, %s96
      %s97 = sphi 0, %s94
      %s98 = sphi 0, %s97
      %s114 = sphi 0, %s98
    $region4: #{tpu_custom_call.1} parent=1 // loop_header_branch
      %19 = sbr.rel (%p17) target = $region8
    $region5: #{tpu_custom_call.1} parent=1 // loop_body
      %s21 = ssub.s32 %s16, 1
      %s22 = ssub.s32 %s16, 2
      %s23 = sadd.s32 %s16, 1
      %s24 = ssub.s32 %s16, %s23
      %p25 = scmp.eq.s32.totalorder %s24, 0
      %s27 = sadd.s32 %s26, 1
      %s28 = scalar_select %p25, %s26, %s27
      %p31 = pneg %p25
      %p32 = scmp.eq.s32.totalorder %s16, 1
      %p33 = por %p31, %p32
      %p34 = scmp.ne.s32.totalorder %s26, %s29
      %p35 = scmp.eq.s32.totalorder %s16, 0
      %p36 = por %p34, %p35
      %p37 = scmp.ne.s32.totalorder %s26, %s29
      %p38 = scmp.eq.s32.totalorder %s21, 1
      %p39 = por %p37, %p38
      %p40 = scmp.ne.s32.totalorder %s29, %s30
      %p41 = scmp.eq.s32.totalorder %s21, 0
      %p42 = por %p40, %p41
      %p43 = scmp.ne.s32.totalorder %s29, %s30
      %p44 = scmp.eq.s32.totalorder %s22, 1
      %p45 = por %p43, %p44
      %p47 = scmp.ne.s32.totalorder %s30, %s46
      %p48 = scmp.eq.s32.totalorder %s22, 0
      %p49 = por %p47, %p48
      %s51 = sadd.s32 %s50, 1
      %p54 = scmp.eq.s32.totalorder %s16, 1
      %p55 = scmp.ne.s32.totalorder %s50, %s52
      %p56 = scmp.eq.s32.totalorder %s16, 0
      %p57 = por %p55, %p56
      %p58 = scmp.ne.s32.totalorder %s50, %s52
      %p59 = scmp.eq.s32.totalorder %s21, 1
      %p60 = por %p58, %p59
      %p61 = scmp.ne.s32.totalorder %s52, %s53
      %p62 = scmp.eq.s32.totalorder %s21, 0
      %p63 = por %p61, %p62
      %p64 = scmp.ne.s32.totalorder %s52, %s53
      %p65 = scmp.eq.s32.totalorder %s22, 1
      %p66 = por %p64, %p65
      %p68 = scmp.ne.s32.totalorder %s53, %s67
      %p69 = scmp.eq.s32.totalorder %s22, 0
      %p70 = por %p68, %p69
      %s72 = sadd.s32 %s71, 1
      %p75 = scmp.eq.s32.totalorder %s16, 1
      %p76 = scmp.ne.s32.totalorder %s71, %s73
      %p77 = scmp.eq.s32.totalorder %s16, 0
      %p78 = por %p76, %p77
      %p79 = scmp.ne.s32.totalorder %s71, %s73
      %p80 = scmp.eq.s32.totalorder %s21, 1
      %p81 = por %p79, %p80
      %p82 = scmp.ne.s32.totalorder %s73, %s74
      %p83 = scmp.eq.s32.totalorder %s21, 0
      %p84 = por %p82, %p83
      %p85 = scmp.ne.s32.totalorder %s73, %s74
      %p86 = scmp.eq.s32.totalorder %s22, 1
      %p87 = por %p85, %p86
      %p89 = scmp.ne.s32.totalorder %s74, %s88
      %p90 = scmp.eq.s32.totalorder %s22, 0
      %p91 = por %p89, %p90
      %s92 = ssub.s32 %s16, %s23
      %p93 = scmp.eq.s32.totalorder %s92, 0
      %s95 = sadd.s32 %s94, 1
      %s96 = scalar_select %p93, %s94, %s95
      %p99 = pneg %p93
      %p100 = scmp.eq.s32.totalorder %s16, 1
      %p101 = por %p99, %p100
      %p102 = scmp.ne.s32.totalorder %s94, %s97
      %p103 = scmp.eq.s32.totalorder %s16, 0
      %p104 = por %p102, %p103
      %p105 = scmp.ne.s32.totalorder %s94, %s97
      %p106 = scmp.eq.s32.totalorder %s21, 1
      %p107 = por %p105, %p106
      %p108 = scmp.ne.s32.totalorder %s97, %s98
      %p109 = scmp.eq.s32.totalorder %s21, 0
      %p110 = por %p108, %p109
      %p111 = scmp.ne.s32.totalorder %s97, %s98
      %p112 = scmp.eq.s32.totalorder %s22, 1
      %p113 = por %p111, %p112
      %p115 = scmp.ne.s32.totalorder %s98, %s114
      %p116 = scmp.eq.s32.totalorder %s22, 0
      %p117 = por %p115, %p116
      %p118 = scmp.le.s32.totalorder 1, %s16
      %p119 = scmp.lt.s32.totalorder %s16, 3
      %p120 = pnand %p118, %p119
      %p121 = pneg %p120
      // Predicated region
      $region9: #{tpu_custom_call.1} parent=5 // pred_check
        _
      $region10: #{tpu_custom_call.1} parent=5 // pred_check_branch
        %123 = sbr.rel (%p120) target = $region12
      $region11: #{tpu_custom_call.1} parent=5 // pred_region
        %s124 = ssub.s32 %s16, 1
        // Predicated region
        $region13: #{tpu_custom_call.1} parent=11 // pred_check
          %p125 = pneg %p63
        $region14: #{tpu_custom_call.1} parent=11 // pred_check_branch
          %127 = sbr.rel (%p125) target = $region16
        $region15: #{tpu_custom_call.1} parent=11 // pred_region
          %s129 = ssub.s32 6144, 6144
          %130 = vsyncadd [#allocation6], %s129
          %s131 = sshll.u32 [#allocation5], 4
          %s132 = int_to_ptr.vmem [resolvable:$true] %s131
          %137 = dma.hbm_to_vmem [thread:$0]  %s1, 6144, %s132, [#allocation6], 384, 384, 24
        $region16: #{tpu_custom_call.1} parent=11 // pred_fallthru
          _
        // Predicated region
        $region17: #{tpu_custom_call.1} parent=11 // pred_check
          %p138 = pneg %p84
        $region18: #{tpu_custom_call.1} parent=11 // pred_check_branch
          %140 = sbr.rel (%p138) target = $region20
        $region19: #{tpu_custom_call.1} parent=11 // pred_region
          _
        $region20: #{tpu_custom_call.1} parent=11 // pred_fallthru
          _
      $region12: #{tpu_custom_call.1} parent=5 // pred_fallthru
        _
      %p141 = scmp.lt.s32.totalorder %s16, 2
      // Predicated region
      $region21: #{tpu_custom_call.1} parent=5 // pred_check
        %p142 = pneg %p141
      $region22: #{tpu_custom_call.1} parent=5 // pred_check_branch
        %144 = sbr.rel (%p142) target = $region24
      $region23: #{tpu_custom_call.1} parent=5 // pred_region
        // Predicated region
        $region25: #{tpu_custom_call.1} parent=23 // pred_check
          %p145 = pneg %p36
        $region26: #{tpu_custom_call.1} parent=23 // pred_check_branch
          %147 = sbr.rel (%p145) target = $region28
        $region27: #{tpu_custom_call.1} parent=23 // pred_region
          %s148 = sand.u32 %s26, 1
          %s149 = scalar_lea.sflag [#allocation3], %s148
          %s150 = sand.u32 %s26, 1
          %s151 = smul.addr %s150, 8
          %s152 = scalar_lea.vmem [#allocation2], %s151
          %s154 = ssub.s32 128, 128
          %155 = vsyncadd %s149, %s154
          %s156 = smul.addr %s16, 128
          %s157 = scalar_lea.hbm %s0, %s156
          %s159 = sshll.u32 %s152, 4
          %s160 = int_to_ptr.vmem [resolvable:$true] %s159
          %162 = dma.hbm_to_vmem [thread:$0]  %s157, 128, %s160, %s149
        $region28: #{tpu_custom_call.1} parent=23 // pred_fallthru
          _
      $region24: #{tpu_custom_call.1} parent=5 // pred_fallthru
        _
      %p163 = scmp.le.s32.totalorder 1, %s16
      %p164 = scmp.lt.s32.totalorder %s16, 3
      %p165 = pnand %p163, %p164
      %p166 = pneg %p165
      // Predicated region
      $region29: #{tpu_custom_call.1} parent=5 // pred_check
        _
      $region30: #{tpu_custom_call.1} parent=5 // pred_check_branch
        %168 = sbr.rel (%p165) target = $region32
      $region31: #{tpu_custom_call.1} parent=5 // pred_region
        %s169 = ssub.s32 %s16, 1
        %s170 = sand.u32 %s29, 1
        %s171 = scalar_lea.sflag [#allocation3], %s170
        %s172 = sand.u32 %s29, 1
        %s173 = smul.addr %s172, 8
        %s174 = scalar_lea.vmem [#allocation2], %s173
        // Predicated region
        $region33: #{tpu_custom_call.1} parent=31 // pred_check
          %p175 = pneg %p42
        $region34: #{tpu_custom_call.1} parent=31 // pred_check_branch
          %177 = sbr.rel (%p175) target = $region36
        $region35: #{tpu_custom_call.1} parent=31 // pred_region
          %178 = dma.done %s171, 128
        $region36: #{tpu_custom_call.1} parent=31 // pred_fallthru
          _
        // Predicated region
        $region37: #{tpu_custom_call.1} parent=31 // pred_check
          %p179 = pneg %p63
        $region38: #{tpu_custom_call.1} parent=31 // pred_check_branch
          %181 = sbr.rel (%p179) target = $region40
        $region39: #{tpu_custom_call.1} parent=31 // pred_region
          %182 = dma.done [#allocation6], 6144
        $region40: #{tpu_custom_call.1} parent=31 // pred_fallthru
          _
        %s183 = sand.u32 %s29, 1
        %s184 = scalar_lea.sflag [#allocation3], %s183
        %s185 = sand.u32 %s29, 1
        %s186 = smul.addr %s185, 8
        %s187 = scalar_lea.vmem [#allocation2], %s186
        %p188 = pneg %p42
        %p189 = pneg %p39
        %p190 = pneg %p63
        %p191 = pneg %p60
        %p192 = pneg %p84
        %p193 = pneg %p81
        %p194 = pneg %p110
        %p195 = pneg %p107
        %s196 = sand.u32 %s97, 1
        %s197 = scalar_lea.sflag [#allocation4], %s196
        %s198 = sand.u32 %s97, 1
        %s199 = smul.addr %s198, 24
        %s200 = scalar_lea.vmem [#allocation7], %s199
        %v201 = vld [vmem:[%s174] sm:$0xff]
        %v202 = vld [vmem:[#allocation5] sm:$0xff]
        %v203 = vld [vmem:[#allocation5 + $0x8] sm:$0xff]
        %v204 = vld [vmem:[#allocation5 + $0x10] sm:$0xff]
        %v205 = vld [vmem:[#allocation5 + $0x18] sm:$0xff]
        %v206 = vld [vmem:[#allocation5 + $0x20] sm:$0xff]
        %v207 = vld [vmem:[#allocation5 + $0x28] sm:$0xff]
        %v208 = vld [vmem:[#allocation5 + $0x30] sm:$0xff]
        %v209 = vld [vmem:[#allocation5 + $0x38] sm:$0xff]
        %v210 = vld [vmem:[#allocation5 + $0x40] sm:$0xff]
        %v211 = vld [vmem:[#allocation5 + $0x48] sm:$0xff]
        %v212 = vld [vmem:[#allocation5 + $0x50] sm:$0xff]
        %v213 = vld [vmem:[#allocation5 + $0x58] sm:$0xff]
        %v214 = vld [vmem:[#allocation5 + $0x60] sm:$0xff]
        %v215 = vld [vmem:[#allocation5 + $0x68] sm:$0xff]
        %v216 = vld [vmem:[#allocation5 + $0x70] sm:$0xff]
        %v217 = vld [vmem:[#allocation5 + $0x78] sm:$0xff]
        %v218 = vld [vmem:[#allocation5 + $0x80] sm:$0xff]
        %v219 = vld [vmem:[#allocation5 + $0x88] sm:$0xff]
        %v220 = vld [vmem:[#allocation5 + $0x90] sm:$0xff]
        %v221 = vld [vmem:[#allocation5 + $0x98] sm:$0xff]
        %v222 = vld [vmem:[#allocation5 + $0xa0] sm:$0xff]
        %v223 = vld [vmem:[#allocation5 + $0xa8] sm:$0xff]
        %v224 = vld [vmem:[#allocation5 + $0xb0] sm:$0xff]
        %v225 = vld [vmem:[#allocation5 + $0xb8] sm:$0xff]
        %v226 = vld [vmem:[#allocation5 + $0xc0] sm:$0xff]
        %v227 = vld [vmem:[#allocation5 + $0xc8] sm:$0xff]
        %v228 = vld [vmem:[#allocation5 + $0xd0] sm:$0xff]
        %v229 = vld [vmem:[#allocation5 + $0xd8] sm:$0xff]
        %v230 = vld [vmem:[#allocation5 + $0xe0] sm:$0xff]
        %v231 = vld [vmem:[#allocation5 + $0xe8] sm:$0xff]
        %v232 = vld [vmem:[#allocation5 + $0xf0] sm:$0xff]
        %v233 = vld [vmem:[#allocation5 + $0xf8] sm:$0xff]
        %v234 = vld [vmem:[#allocation5 + $0x100] sm:$0xff]
        %v235 = vld [vmem:[#allocation5 + $0x108] sm:$0xff]
        %v236 = vld [vmem:[#allocation5 + $0x110] sm:$0xff]
        %v237 = vld [vmem:[#allocation5 + $0x118] sm:$0xff]
        %v238 = vld [vmem:[#allocation5 + $0x120] sm:$0xff]
        %v239 = vld [vmem:[#allocation5 + $0x128] sm:$0xff]
        %v240 = vld [vmem:[#allocation5 + $0x130] sm:$0xff]
        %v241 = vld [vmem:[#allocation5 + $0x138] sm:$0xff]
        %v242 = vld [vmem:[#allocation5 + $0x140] sm:$0xff]
        %v243 = vld [vmem:[#allocation5 + $0x148] sm:$0xff]
        %v244 = vld [vmem:[#allocation5 + $0x150] sm:$0xff]
        %v245 = vld [vmem:[#allocation5 + $0x158] sm:$0xff]
        %v246 = vld [vmem:[#allocation5 + $0x160] sm:$0xff]
        %v247 = vld [vmem:[#allocation5 + $0x168] sm:$0xff]
        %v248 = vld [vmem:[#allocation5 + $0x170] sm:$0xff]
        %v249 = vld [vmem:[#allocation5 + $0x178] sm:$0xff]
        %v250 = vld [vmem:[%s2] sm:$0x7]
        %v252 = vlaneseq
        %v253 = vshrl.u32 %v252, 7
        %v254 = vsub.s32 0, %v253
        %v255 = vrot.slane %v250, %v254
        %v256 = vlaneseq
        %v257 = vshrl.u32 %v256, 7
        %v258 = vsub.s32 1, %v257
        %v259 = vrot.slane %v250, %v258
        %v260 = vlaneseq
        %v261 = vshrl.u32 %v260, 7
        %v262 = vsub.s32 2, %v261
        %v263 = vrot.slane %v250, %v262
        %267 = vmatprep.subr.mxu0 %v248
        %268 = vmatpush1.msra.mxu0 %v247
        %269 = vmatprep.subr.mxu0 %v245
        %270 = vmatpush1.msra.mxu0 %v244
        %271 = vmatprep.subr.mxu0 %v242
        %272 = vmatpush1.msra.mxu0 %v241
        %273 = vmatprep.subr.mxu0 %v239
        %274 = vmatpush1.msra.mxu0 %v238
        %275 = vmatprep.subr.mxu0 %v236
        %276 = vmatpush1.msra.mxu0 %v235
        %277 = vmatprep.subr.mxu0 %v233
        %278 = vmatpush1.msra.mxu0 %v232
        %279 = vmatprep.subr.mxu0 %v230
        %280 = vmatpush1.msra.mxu0 %v229
        %281 = vmatprep.subr.mxu0 %v227
        %282 = vmatpush1.msra.mxu0 %v226
        %283 = vmatprep.subr.mxu0 %v224
        %284 = vmatpush1.msra.mxu0 %v223
        %285 = vmatprep.subr.mxu0 %v221
        %286 = vmatpush1.msra.mxu0 %v220
        %287 = vmatprep.subr.mxu0 %v218
        %288 = vmatpush1.msra.mxu0 %v217
        %289 = vmatprep.subr.mxu0 %v215
        %290 = vmatpush1.msra.mxu0 %v214
        %291 = vmatprep.subr.mxu0 %v212
        %292 = vmatpush1.msra.mxu0 %v211
        %293 = vmatprep.subr.mxu0 %v209
        %294 = vmatpush1.msra.mxu0 %v208
        %295 = vmatprep.subr.mxu0 %v206
        %296 = vmatpush1.msra.mxu0 %v205
        %297 = vmatprep.subr.mxu0 %v203
        %298 = vmatpush1.msra.mxu0 %v202
        %299 = vmatprep.subr.mxu0 0.0
        %300 = vmatpush2.msra.mxu0 0.0
        %301 = vmatprep.subr.mxu0 0.0
        %302 = vmatpush2.msra.mxu0 0.0
        %303 = vmatprep.subr.mxu0 0.0
        %304 = vmatpush2.msra.mxu0 0.0
        %305 = vmatprep.subr.mxu0 0.0
        %306 = vmatpush2.msra.mxu0 0.0
        %307 = vmatprep.subr.mxu0 0.0
        %308 = vmatpush2.msra.mxu0 0.0
        %309 = vmatprep.subr.mxu0 0.0
        %310 = vmatpush2.msra.mxu0 0.0
        %311 = vmatprep.subr.mxu0 0.0
        %312 = vmatpush2.msra.mxu0 0.0
        %313 = vmatprep.subr.mxu0 0.0
        %314 = vmatpush2.msra.mxu0 0.0
        %315 = vmatprep.subr.mxu0 0.0
        %316 = vmatpush2.msra.mxu0 0.0
        %317 = vmatprep.subr.mxu0 0.0
        %318 = vmatpush2.msra.mxu0 0.0
        %319 = vmatprep.subr.mxu0 0.0
        %320 = vmatpush2.msra.mxu0 0.0
        %321 = vmatprep.subr.mxu0 0.0
        %322 = vmatpush2.msra.mxu0 0.0
        %323 = vmatprep.subr.mxu0 0.0
        %324 = vmatpush2.msra.mxu0 0.0
        %325 = vmatprep.subr.mxu0 0.0
        %326 = vmatpush2.msra.mxu0 0.0
        %327 = vmatprep.subr.mxu0 0.0
        %328 = vmatpush2.msra.mxu0 0.0
        %329 = vmatprep.subr.mxu0 0.0
        %330 = vmatpush2.msra.mxu0 0.0
        %331 = vmatprep.mubr.f32.mxu0 0.0
        %332 = vmatmul.mubr.f32.gmra.mxu0 %v201
        %v333 = vpop.f32.mrf.mxu0
        %v334 = vadd.f32 %v255, %v333
        %v335 = vpop.f32.mrf.mxu0
        %v336 = vadd.f32 %v259, %v335
        %337 = vdwg.mxu0
        %338 = vmatprep.subr.mxu0 0.0
        %339 = vmatpush1.msra.mxu0 %v249
        %340 = vmatprep.subr.mxu0 0.0
        %341 = vmatpush1.msra.mxu0 %v246
        %342 = vmatprep.subr.mxu0 0.0
        %343 = vmatpush1.msra.mxu0 %v243
        %344 = vmatprep.subr.mxu0 0.0
        %345 = vmatpush1.msra.mxu0 %v240
        %346 = vmatprep.subr.mxu0 0.0
        %347 = vmatpush1.msra.mxu0 %v237
        %348 = vmatprep.subr.mxu0 0.0
        %349 = vmatpush1.msra.mxu0 %v234
        %350 = vmatprep.subr.mxu0 0.0
        %351 = vmatpush1.msra.mxu0 %v231
        %352 = vmatprep.subr.mxu0 0.0
        %353 = vmatpush1.msra.mxu0 %v228
        %354 = vmatprep.subr.mxu0 0.0
        %355 = vmatpush1.msra.mxu0 %v225
        %356 = vmatprep.subr.mxu0 0.0
        %357 = vmatpush1.msra.mxu0 %v222
        %358 = vmatprep.subr.mxu0 0.0
        %359 = vmatpush1.msra.mxu0 %v219
        %360 = vmatprep.subr.mxu0 0.0
        %361 = vmatpush1.msra.mxu0 %v216
        %362 = vmatprep.subr.mxu0 0.0
        %363 = vmatpush1.msra.mxu0 %v213
        %364 = vmatprep.subr.mxu0 0.0
        %365 = vmatpush1.msra.mxu0 %v210
        %366 = vmatprep.subr.mxu0 0.0
        %367 = vmatpush1.msra.mxu0 %v207
        %368 = vmatprep.subr.mxu0 0.0
        %369 = vmatpush1.msra.mxu0 %v204
        %370 = vmatprep.subr.mxu0 0.0
        %371 = vmatpush2.msra.mxu0 0.0
        %372 = vmatprep.subr.mxu0 0.0
        %373 = vmatpush2.msra.mxu0 0.0
        %374 = vmatprep.subr.mxu0 0.0
        %375 = vmatpush2.msra.mxu0 0.0
        %376 = vmatprep.subr.mxu0 0.0
        %377 = vmatpush2.msra.mxu0 0.0
        %378 = vmatprep.subr.mxu0 0.0
        %379 = vmatpush2.msra.mxu0 0.0
        %380 = vmatprep.subr.mxu0 0.0
        %381 = vmatpush2.msra.mxu0 0.0
        %382 = vmatprep.subr.mxu0 0.0
        %383 = vmatpush2.msra.mxu0 0.0
        %384 = vmatprep.subr.mxu0 0.0
        %385 = vmatpush2.msra.mxu0 0.0
        %386 = vmatprep.subr.mxu0 0.0
        %387 = vmatpush2.msra.mxu0 0.0
        %388 = vmatprep.subr.mxu0 0.0
        %389 = vmatpush2.msra.mxu0 0.0
        %390 = vmatprep.subr.mxu0 0.0
        %391 = vmatpush2.msra.mxu0 0.0
        %392 = vmatprep.subr.mxu0 0.0
        %393 = vmatpush2.msra.mxu0 0.0
        %394 = vmatprep.subr.mxu0 0.0
        %395 = vmatpush2.msra.mxu0 0.0
        %396 = vmatprep.subr.mxu0 0.0
        %397 = vmatpush2.msra.mxu0 0.0
        %398 = vmatprep.subr.mxu0 0.0
        %399 = vmatpush2.msra.mxu0 0.0
        %400 = vmatprep.subr.mxu0 0.0
        %401 = vmatpush2.msra.mxu0 0.0
        %402 = vmatprep.mubr.f32.mxu0 0.0
        %403 = vmatmul.mubr.f32.gmra.mxu0 %v201
        %v404 = vpop.f32.mrf.mxu0
        %v405 = vadd.f32 %v263, %v404
        %v406 = vpop.f32.mrf.mxu0
        %407 = vdwg.mxu0
        %408 = vst [vmem:[%s200] sm:$0xff] %v334
        %409 = vst [vmem:[%s200 + $0x8] sm:$0xff] %v336
        %410 = vst [vmem:[%s200 + $0x10] sm:$0xff] %v405
        %s411 = sand.u32 %s97, 1
        %s412 = scalar_lea.sflag [#allocation4], %s411
        %s413 = sand.u32 %s97, 1
        %s414 = smul.addr %s413, 24
        %s415 = scalar_lea.vmem [#allocation7], %s414
        // Predicated region
        $region41: #{tpu_custom_call.1} parent=31 // pred_check
          %p416 = pneg %p107
        $region42: #{tpu_custom_call.1} parent=31 // pred_check_branch
          %418 = sbr.rel (%p416) target = $region44
        $region43: #{tpu_custom_call.1} parent=31 // pred_region
          %s420 = ssub.s32 384, 384
          %421 = vsyncadd %s412, %s420
          %s422 = smul.addr %s21, 3
          %s423 = smul.addr %s422, 128
          %s424 = scalar_lea.hbm %s3, %s423
          %s426 = sshll.u32 %s415, 4
          %s427 = int_to_ptr.vmem [resolvable:$true] %s426
          %429 = dma.vmem_to_hbm [thread:$0]  %s427, 384, %s424, %s412
        $region44: #{tpu_custom_call.1} parent=31 // pred_fallthru
          _
      $region32: #{tpu_custom_call.1} parent=5 // pred_fallthru
        _
      %p430 = scmp.le.s32.totalorder 2, %s16
      // Predicated region
      $region45: #{tpu_custom_call.1} parent=5 // pred_check
        %p431 = pneg %p430
      $region46: #{tpu_custom_call.1} parent=5 // pred_check_branch
        %433 = sbr.rel (%p431) target = $region48
      $region47: #{tpu_custom_call.1} parent=5 // pred_region
        %s434 = ssub.s32 %s16, 2
        // Predicated region
        $region49: #{tpu_custom_call.1} parent=47 // pred_check
          %p435 = pneg %p113
        $region50: #{tpu_custom_call.1} parent=47 // pred_check_branch
          %437 = sbr.rel (%p435) target = $region52
        $region51: #{tpu_custom_call.1} parent=47 // pred_region
          %s438 = sand.u32 %s98, 1
          %s439 = scalar_lea.sflag [#allocation4], %s438
          %s440 = sand.u32 %s98, 1
          %s441 = smul.addr %s440, 24
          %s442 = scalar_lea.vmem [#allocation7], %s441
          %443 = dma.done %s439, 384
        $region52: #{tpu_custom_call.1} parent=47 // pred_fallthru
          _
      $region48: #{tpu_custom_call.1} parent=5 // pred_fallthru
        _
    $region6: #{tpu_custom_call.1} parent=1 // loop_footer
      %s20 = sadd.s32 1, %s16
    $region7: #{tpu_custom_call.1} parent=1 // loop_footer_branch
      %15 = sbr.rel target = $region3
    $region8: #{tpu_custom_call.1} parent=1 // loop_exit
      _
    %444 = vsyncpa [#allocation3], 1
    %s445 = scalar_lea.sflag [#allocation3], 1
    %446 = vsyncpa %s445, 1
    %447 = vsyncpa [#allocation6], 1
    %448 = vsyncpa [#allocation4], 1
    %s449 = scalar_lea.sflag [#allocation4], 1
    %450 = vsyncpa %s449, 1

</llo_original>
